<compile_context>
chip_gen: v7x
topology: tpu7x:2x2x1
jax: 0.10.0
libtpu: 0.0.40
codegen_flags: <defaults>
</compile_context>

<pallas_src>
import jax
import jax.numpy as jnp
from jax.experimental import pallas as pl
from jax.experimental.pallas import tpu as pltpu

IN_FEATURES = 7
H1 = 70
H1_PAD = 128   # lane-dense hidden-1 width (multiple of 128)
H2 = 512
OUT_FEATURES = 7
OUT_PAD = 128  # lane-dense output width (multiple of 128)


def _round_up(n, m):
    return ((n + m - 1) // m) * m


def _cdiv(a, b):
    return -(-a // b)


def mlp_kernel(x_ref, w1_ref, b1_ref, w2_ref, b2_ref, w3_ref, b3_ref, o_ref):
    # (TM, 7) bf16 @ (7, 128) bf16 -> f32 on the MXU; bias-add + ReLU stay on the VPU
    # (free filler while the MXU result FIFO drains), then recast to bf16 for the next dot.
    h1 = jnp.dot(x_ref[...], w1_ref[...], preferred_element_type=jnp.float32)
    h1 = jnp.maximum(h1 + b1_ref[...], 0.0).astype(jnp.bfloat16)

    h2 = jnp.dot(h1, w2_ref[...], preferred_element_type=jnp.float32)
    h2 = jnp.maximum(h2 + b2_ref[...], 0.0).astype(jnp.bfloat16)

    out = jnp.dot(h2, w3_ref[...], preferred_element_type=jnp.float32) + b3_ref[...]
    o_ref[...] = out.astype(o_ref.dtype)  # lane-dense (TM, 128) bf16 store, no vst.msk


def prepare_params(params):
    """One-time conversion of PyTorch-style (in,out) f32 params into kernel-ready operands.

    Call this once per parameter set; pass the result to neural_network_forward repeatedly.
    """
    w1, b1, w2, b2, w3, b3 = params
    w1p = jnp.zeros((IN_FEATURES, H1_PAD), jnp.bfloat16).at[:, :H1].set(
        w1.astype(jnp.bfloat16))
    b1p = jnp.zeros((1, H1_PAD), jnp.float32).at[:, :H1].set(
        b1.reshape(1, H1).astype(jnp.float32))
    w2p = jnp.zeros((H1_PAD, H2), jnp.bfloat16).at[:H1, :].set(
        w2.astype(jnp.bfloat16))
    b2p = b2.reshape(1, H2).astype(jnp.float32)
    w3p = jnp.zeros((H2, OUT_PAD), jnp.bfloat16).at[:, :OUT_FEATURES].set(
        w3.astype(jnp.bfloat16))
    b3p = jnp.zeros((1, OUT_PAD), jnp.float32).at[:, :OUT_FEATURES].set(
        b3.reshape(1, OUT_FEATURES).astype(jnp.float32))
    return (w1p, b1p, w2p, b2p, w3p, b3p)


def neural_network_forward(x, prepared_params, *, tm_max=1024,
                           small_batch_threshold=256, force_pallas=False):
    """x: (B, ...) flattened to (B, 7); returns logits (B, 7) in float32."""
    w1p, b1p, w2p, b2p, w3p, b3p = prepared_params

    B = x.shape[0]
    x2d = x.reshape(B, -1)  # nn.Flatten()
    assert x2d.shape[1] == IN_FEATURES
    xb = x2d.astype(jnp.bfloat16)

    # Small-batch fast path: a single tiny grid step is launch/DMA dominated; plain XLA wins.
    if B < small_batch_threshold and not force_pallas:
        h1 = jnp.maximum(jnp.dot(xb, w1p, preferred_element_type=jnp.float32) + b1p, 0.0)
        h2 = jnp.maximum(
            jnp.dot(h1.astype(jnp.bfloat16), w2p, preferred_element_type=jnp.float32) + b2p,
            0.0)
        out = jnp.dot(h2.astype(jnp.bfloat16), w3p,
                      preferred_element_type=jnp.float32) + b3p
        return out[:, :OUT_FEATURES]

    # Balanced batch tiles (minimize tail padding); >=2 tiles for large B so v7x megacore
    # ("parallel" grid axis) has something to shard. Harmless on single-TC v5e/v6e.
    num_tiles = _cdiv(B, tm_max)
    if B >= 1024:
        num_tiles = max(num_tiles, 2)
    tm = _round_up(_cdiv(B, num_tiles), 8)
    b_pad = num_tiles * tm
    if b_pad != B:
        xb = jnp.pad(xb, ((0, b_pad - B), (0, 0)))  # zero rows -> bias garbage, sliced away
    grid = (num_tiles,)

    const = lambda i: (0, 0)  # weights/biases: constant block index -> DMA'd once, resident

    flops = 2 * b_pad * (IN_FEATURES * H1_PAD + H1_PAD * H2 + H2 * OUT_PAD)
    bytes_accessed = (
        b_pad * IN_FEATURES * 2                                          # x (bf16)
        + (IN_FEATURES * H1_PAD + H1_PAD * H2 + H2 * OUT_PAD) * 2        # weights (bf16)
        + (H1_PAD + H2 + OUT_PAD) * 4                                    # biases (f32)
        + b_pad * OUT_PAD * 2)                                           # output (bf16)

    out_padded = pl.pallas_call(
        mlp_kernel,
        out_shape=jax.ShapeDtypeStruct((b_pad, OUT_PAD), jnp.bfloat16),
        grid_spec=pltpu.PrefetchScalarGridSpec(
            num_scalar_prefetch=0,
            grid=grid,
            in_specs=[
                pl.BlockSpec((tm, IN_FEATURES), lambda i: (i, 0)),  # x tile
                pl.BlockSpec((IN_FEATURES, H1_PAD), const),         # w1 (padded to 128)
                pl.BlockSpec((1, H1_PAD), const),                   # b1 (padded)
                pl.BlockSpec((H1_PAD, H2), const),                  # w2 (rows padded)
                pl.BlockSpec((1, H2), const),                       # b2
                pl.BlockSpec((H2, OUT_PAD), const),                 # w3 (padded)
                pl.BlockSpec((1, OUT_PAD), const),                  # b3 (padded)
            ],
            out_specs=pl.BlockSpec((tm, OUT_PAD), lambda i: (i, 0)),
        ),
        compiler_params=pltpu.CompilerParams(
            dimension_semantics=("parallel",),      # shards batch tiles across v7x's 2 TCs
            vmem_limit_bytes=32 * 1024 * 1024,      # safe on v5e/v6e/v7x; working set ~3 MB
        ),
        cost_estimate=pl.CostEstimate(
            flops=flops, transcendentals=0, bytes_accessed=bytes_accessed),
    )(xb, w1p, b1p, w2p, b2p, w3p, b3p)

    # Drop padded rows / lanes, upcast bf16 logits back to f32 for the caller.
    return out_padded[:B, :OUT_FEATURES].astype(jnp.float32)


def reference_forward(x, params):
    """Plain-JAX reference with the same bf16-operand / f32-accumulate math (f32 logits)."""
    w1, b1, w2, b2, w3, b3 = params
    xb = x.reshape(x.shape[0], -1).astype(jnp.bfloat16)
    h1 = jnp.maximum(
        jnp.dot(xb, w1.astype(jnp.bfloat16), preferred_element_type=jnp.float32) + b1, 0.0)
    h2 = jnp.maximum(
        jnp.dot(h1.astype(jnp.bfloat16), w2.astype(jnp.bfloat16),
                preferred_element_type=jnp.float32) + b2, 0.0)
    return jnp.dot(h2.astype(jnp.bfloat16), w3.astype(jnp.bfloat16),
                   preferred_element_type=jnp.float32) + b3


def init_params(key):
    """Deterministic init mimicking nn.Linear shapes (weights stored as (in, out))."""
    def linear_init(k, fan_in, fan_out):
        kw, kb = jax.random.split(k)
        bound = 1.0 / (fan_in ** 0.5)
        w = jax.random.uniform(kw, (fan_in, fan_out), jnp.float32, -bound, bound)
        b = jax.random.uniform(kb, (1, fan_out), jnp.float32, -bound, bound)
        return w, b

    k1, k2, k3 = jax.random.split(key, 3)
    w1, b1 = linear_init(k1, IN_FEATURES, H1)
    w2, b2 = linear_init(k2, H1, H2)
    w3, b3 = linear_init(k3, H2, OUT_FEATURES)
    return (w1, b1, w2, b2, w3, b3)


if __name__ == "__main__":
    key = jax.random.PRNGKey(0)
    k_in, k_in2, k_par = jax.random.split(key, 3)

    params = init_params(k_par)
    prepared = prepare_params(params)   # one-time weight prep (bf16 cast + lane padding)

    # Small batch, forced through the Pallas kernel so the kernel path is exercised.
    B = 8
    x = jax.random.normal(k_in, (B, IN_FEATURES), jnp.float32)
    logits = neural_network_forward(x, prepared, force_pallas=True)
    jax.block_until_ready(logits)
    ref = reference_forward(x, params)
    assert logits.shape == (B, OUT_FEATURES)
    assert jnp.allclose(logits, ref, atol=2e-2, rtol=2e-2), \
        f"max abs err {jnp.max(jnp.abs(logits - ref))}"

    # Larger (non-multiple-of-8) batch exercising balanced tiling + tail padding.
    B2 = 300
    x2 = jax.random.normal(k_in2, (B2, IN_FEATURES), jnp.float32)
    logits2 = neural_network_forward(x2, prepared)
    jax.block_until_ready(logits2)
    ref2 = reference_forward(x2, params)
    assert logits2.shape == (B2, OUT_FEATURES)
    assert jnp.allclose(logits2, ref2, atol=2e-2, rtol=2e-2), \
        f"max abs err {jnp.max(jnp.abs(logits2 - ref2))}"

    print("KERNEL_OK")
</pallas_src>

<mosaic_0001>
module attributes {stable_mosaic.version = 11 : i64} {
  func.func @mlp_kernel(%arg0: i32, %arg1: memref<8x7xbf16, #tpu.memory_space<vmem>>, %arg2: memref<7x128xbf16, #tpu.memory_space<vmem>>, %arg3: memref<1x128xf32, #tpu.memory_space<vmem>>, %arg4: memref<128x512xbf16, #tpu.memory_space<vmem>>, %arg5: memref<1x512xf32, #tpu.memory_space<vmem>>, %arg6: memref<512x128xbf16, #tpu.memory_space<vmem>>, %arg7: memref<1x128xf32, #tpu.memory_space<vmem>>, %arg8: memref<8x128xbf16, #tpu.memory_space<vmem>>) attributes {dimension_semantics = [#tpu.dimension_semantics<parallel>], iteration_bounds = array<i64: 1>, scalar_prefetch = 0 : i64, scratch_operands = 0 : i64, tpu.core_type = #tpu.core_type<tc>, window_params = [{transform_indices = @transform_0, window_bounds = array<i64: 8, 7>}, {pipeline_mode = #tpu.pipeline_mode<synchronous>, transform_indices = @transform_1, window_bounds = array<i64: 7, 128>}, {pipeline_mode = #tpu.pipeline_mode<synchronous>, transform_indices = @transform_2, window_bounds = array<i64: 1, 128>}, {pipeline_mode = #tpu.pipeline_mode<synchronous>, transform_indices = @transform_3, window_bounds = array<i64: 128, 512>}, {pipeline_mode = #tpu.pipeline_mode<synchronous>, transform_indices = @transform_4, window_bounds = array<i64: 1, 512>}, {pipeline_mode = #tpu.pipeline_mode<synchronous>, transform_indices = @transform_5, window_bounds = array<i64: 512, 128>}, {pipeline_mode = #tpu.pipeline_mode<synchronous>, transform_indices = @transform_6, window_bounds = array<i64: 1, 128>}, {transform_indices = @transform_7, window_bounds = array<i64: 8, 128>}]} {
    %c0 = arith.constant 0 : index
    %c0_0 = arith.constant 0 : index
    %0 = vector.load %arg1[%c0, %c0_0] : memref<8x7xbf16, #tpu.memory_space<vmem>>, vector<8x7xbf16>
    %c0_1 = arith.constant 0 : index
    %c0_2 = arith.constant 0 : index
    %1 = vector.load %arg2[%c0_1, %c0_2] : memref<7x128xbf16, #tpu.memory_space<vmem>>, vector<7x128xbf16>
    %cst = arith.constant dense<0.000000e+00> : vector<8x128xf32>
    %2 = tpu.matmul %0, %1, %cst {dimension_numbers = #tpu.dot_dimension_numbers<[1], [0], [0], [1], [0, 0, 1, 1], [], []>} : vector<8x7xbf16>, vector<7x128xbf16>, vector<8x128xf32> -> vector<8x128xf32>
    %c0_3 = arith.constant 0 : index
    %c0_4 = arith.constant 0 : index
    %3 = vector.load %arg3[%c0_3, %c0_4] : memref<1x128xf32, #tpu.memory_space<vmem>>, vector<1x128xf32>
    %4 = vector.broadcast %3 : vector<1x128xf32> to vector<8x128xf32>
    %5 = arith.addf %2, %4 : vector<8x128xf32>
    %cst_5 = arith.constant 0.000000e+00 : f32
    %6 = vector.broadcast %cst_5 : f32 to vector<8x128xf32>
    %7 = arith.maximumf %5, %6 : vector<8x128xf32>
    %8 = arith.truncf %7 : vector<8x128xf32> to vector<8x128xbf16>
    %c0_6 = arith.constant 0 : index
    %c0_7 = arith.constant 0 : index
    %9 = vector.load %arg4[%c0_6, %c0_7] : memref<128x512xbf16, #tpu.memory_space<vmem>>, vector<128x512xbf16>
    %cst_8 = arith.constant dense<0.000000e+00> : vector<8x512xf32>
    %10 = tpu.matmul %8, %9, %cst_8 {dimension_numbers = #tpu.dot_dimension_numbers<[1], [0], [0], [1], [0, 0, 1, 1], [], []>} : vector<8x128xbf16>, vector<128x512xbf16>, vector<8x512xf32> -> vector<8x512xf32>
    %c0_9 = arith.constant 0 : index
    %c0_10 = arith.constant 0 : index
    %11 = vector.load %arg5[%c0_9, %c0_10] : memref<1x512xf32, #tpu.memory_space<vmem>>, vector<1x512xf32>
    %12 = vector.broadcast %11 : vector<1x512xf32> to vector<8x512xf32>
    %13 = arith.addf %10, %12 : vector<8x512xf32>
    %cst_11 = arith.constant 0.000000e+00 : f32
    %14 = vector.broadcast %cst_11 : f32 to vector<8x512xf32>
    %15 = arith.maximumf %13, %14 : vector<8x512xf32>
    %16 = arith.truncf %15 : vector<8x512xf32> to vector<8x512xbf16>
    %c0_12 = arith.constant 0 : index
    %c0_13 = arith.constant 0 : index
    %17 = vector.load %arg6[%c0_12, %c0_13] : memref<512x128xbf16, #tpu.memory_space<vmem>>, vector<512x128xbf16>
    %cst_14 = arith.constant dense<0.000000e+00> : vector<8x128xf32>
    %18 = tpu.matmul %16, %17, %cst_14 {dimension_numbers = #tpu.dot_dimension_numbers<[1], [0], [0], [1], [0, 0, 1, 1], [], []>} : vector<8x512xbf16>, vector<512x128xbf16>, vector<8x128xf32> -> vector<8x128xf32>
    %c0_15 = arith.constant 0 : index
    %c0_16 = arith.constant 0 : index
    %19 = vector.load %arg7[%c0_15, %c0_16] : memref<1x128xf32, #tpu.memory_space<vmem>>, vector<1x128xf32>
    %20 = vector.broadcast %19 : vector<1x128xf32> to vector<8x128xf32>
    %21 = arith.addf %18, %20 : vector<8x128xf32>
    %22 = arith.truncf %21 : vector<8x128xf32> to vector<8x128xbf16>
    %c0_17 = arith.constant 0 : index
    %c0_18 = arith.constant 0 : index
    %23 = vector.load %arg8[%c0_17, %c0_18] : memref<8x128xbf16, #tpu.memory_space<vmem>>, vector<8x128xbf16>
    tpu.vector_store %arg8[%c0_17, %c0_18], %22 {strides = array<i32>} : memref<8x128xbf16, #tpu.memory_space<vmem>>, vector<8x128xbf16>,
    return
  }
  func.func @transform_0(%arg0: i32) -> (i32, i32) {
    %c0_i32 = arith.constant 0 : i32
    %c0_i32_0 = arith.constant 0 : i32
    return %arg0, %c0_i32 : i32, i32
  }
  func.func @transform_1(%arg0: i32) -> (i32, i32) {
    %c0_i32 = arith.constant 0 : i32
    %c0_i32_0 = arith.constant 0 : i32
    %c0_i32_1 = arith.constant 0 : i32
    return %c0_i32, %c0_i32_0 : i32, i32
  }
  func.func @transform_2(%arg0: i32) -> (i32, i32) {
    %c0_i32 = arith.constant 0 : i32
    %c0_i32_0 = arith.constant 0 : i32
    %c0_i32_1 = arith.constant 0 : i32
    return %c0_i32, %c0_i32_0 : i32, i32
  }
  func.func @transform_3(%arg0: i32) -> (i32, i32) {
    %c0_i32 = arith.constant 0 : i32
    %c0_i32_0 = arith.constant 0 : i32
    %c0_i32_1 = arith.constant 0 : i32
    return %c0_i32, %c0_i32_0 : i32, i32
  }
  func.func @transform_4(%arg0: i32) -> (i32, i32) {
    %c0_i32 = arith.constant 0 : i32
    %c0_i32_0 = arith.constant 0 : i32
    %c0_i32_1 = arith.constant 0 : i32
    return %c0_i32, %c0_i32_0 : i32, i32
  }
  func.func @transform_5(%arg0: i32) -> (i32, i32) {
    %c0_i32 = arith.constant 0 : i32
    %c0_i32_0 = arith.constant 0 : i32
    %c0_i32_1 = arith.constant 0 : i32
    return %c0_i32, %c0_i32_0 : i32, i32
  }
  func.func @transform_6(%arg0: i32) -> (i32, i32) {
    %c0_i32 = arith.constant 0 : i32
    %c0_i32_0 = arith.constant 0 : i32
    %c0_i32_1 = arith.constant 0 : i32
    return %c0_i32, %c0_i32_0 : i32, i32
  }
  func.func @transform_7(%arg0: i32) -> (i32, i32) {
    %c0_i32 = arith.constant 0 : i32
    %c0_i32_0 = arith.constant 0 : i32
    return %arg0, %c0_i32 : i32, i32
  }
}

</mosaic_0001>

<llo_original>
// kernel: tpu_custom_call.1
$region0: #{tpu_custom_call.1}
  #allocation0 [shape = 'u32[]', space=smem, size = 0x4, offset = 0x4, fixed_abs, tag = 'smem constant byte address 0x4 - core index']
  #allocation1 [shape = 'u32[144,128]{1,0:T(1,128)}', space=vmem, size = 0x12000, scoped, tag = 'internal scratch']
  %s0 = inlined_call_operand.hbm [shape: bf16[8,7], index: 0, kind: input, shape index: {}]
  %s1 = inlined_call_operand.hbm [shape: bf16[7,128], index: 1, kind: input, shape index: {}]
  %s2 = inlined_call_operand.vmem [shape: f32[1,128], index: 2, kind: input, shape index: {}]
  %s3 = inlined_call_operand.hbm [shape: bf16[128,512], index: 3, kind: input, shape index: {}]
  %s4 = inlined_call_operand.vmem [shape: f32[1,512], index: 4, kind: input, shape index: {}]
  %s5 = inlined_call_operand.hbm [shape: bf16[512,128], index: 5, kind: input, shape index: {}]
  %s6 = inlined_call_operand.vmem [shape: f32[1,128], index: 6, kind: input, shape index: {}]
  %s7 = inlined_call_operand.hbm [shape: bf16[8,128], index: 7, kind: output, shape index: {}]
  %s8 = sld [smem:[#allocation0]]
  $region54: #{tpu_custom_call.1} parent=0
    _
  %s10 = ssub.s32 1, %s8
  %s11 = scalar_select 0, %s10, %s8
  $region1: #{tpu_custom_call.1} parent=0
    #allocation2 [shape = 'u8[2048]{0}', space=vmem, size = 0x800, scoped, tag = 'input window, operand 0, single buffered']
    #allocation3 [shape = 's32[1]{0}', space=sflag, size = 0x4, scoped, tag = 'scoped memory for tpu_custom_call.1']
    #allocation4 [shape = 's32[1]{0}', space=sflag, size = 0x4, scoped, tag = 'scoped memory for tpu_custom_call.1']
    #allocation5 [shape = 'u8[2048]{0}', space=vmem, size = 0x800, scoped, tag = 'input window, operand 1, single buffered']
    #allocation6 [shape = 's32[1]{0}', space=sflag, size = 0x4, scoped, tag = 'scoped memory for tpu_custom_call.1']
    #allocation7 [shape = 'u8[131072]{0}', space=vmem, size = 0x20000, scoped, tag = 'input window, operand 3, single buffered']
    #allocation8 [shape = 'u8[131072]{0}', space=vmem, size = 0x20000, scoped, tag = 'input window, operand 5, single buffered']
    #allocation9 [shape = 's32[1]{0}', space=sflag, size = 0x4, scoped, tag = 'scoped memory for tpu_custom_call.1']
    #allocation10 [shape = 'u8[2048]{0}', space=vmem, size = 0x800, scoped, tag = 'output window, operand 0, single buffered']
    %12 = vsyncpa [#allocation3], 0
    %13 = vsyncpa [#allocation6], 0
    %14 = vsyncpa [#allocation9], 0
    %15 = vsyncpa [#allocation4], 0
    // Predicated region
    $region2: #{tpu_custom_call.1} parent=1 // pred_check
      _
    $region3: #{tpu_custom_call.1} parent=1 // pred_check_branch
      %17 = sbr.rel (0) target = $region5
    $region4: #{tpu_custom_call.1} parent=1 // pred_region
      %s19 = ssub.s32 64, 64
      %20 = vsyncadd [#allocation3], %s19
      %s22 = sshll.u32 [#allocation2], 4
      %s23 = int_to_ptr.vmem [resolvable:$true] %s22
      %25 = dma.hbm_to_vmem [thread:$0]  %s0, 64, %s23, [#allocation3]
    $region5: #{tpu_custom_call.1} parent=1 // pred_fallthru
      _
    // Predicated region
    $region6: #{tpu_custom_call.1} parent=1 // pred_check
      _
    $region7: #{tpu_custom_call.1} parent=1 // pred_check_branch
      %27 = sbr.rel (0) target = $region9
    $region8: #{tpu_custom_call.1} parent=1 // pred_region
      %s29 = ssub.s32 64, 64
      %30 = vsyncadd [#allocation6], %s29
      %s32 = sshll.u32 [#allocation5], 4
      %s33 = int_to_ptr.vmem [resolvable:$true] %s32
      %35 = dma.hbm_to_vmem [thread:$0]  %s1, 64, %s33, [#allocation6]
    $region9: #{tpu_custom_call.1} parent=1 // pred_fallthru
      _
    // Predicated region
    $region10: #{tpu_custom_call.1} parent=1 // pred_check
      _
    $region11: #{tpu_custom_call.1} parent=1 // pred_check_branch
      %37 = sbr.rel (0) target = $region13
    $region12: #{tpu_custom_call.1} parent=1 // pred_region
      _
    $region13: #{tpu_custom_call.1} parent=1 // pred_fallthru
      _
    // Predicated region
    $region14: #{tpu_custom_call.1} parent=1 // pred_check
      _
    $region15: #{tpu_custom_call.1} parent=1 // pred_check_branch
      %39 = sbr.rel (0) target = $region17
    $region16: #{tpu_custom_call.1} parent=1 // pred_region
      %s41 = ssub.s32 4096, 4096
      %42 = vsyncadd [#allocation6], %s41
      %s43 = sshll.u32 [#allocation7], 4
      %s44 = int_to_ptr.vmem [resolvable:$true] %s43
      %49 = dma.hbm_to_vmem [thread:$0]  %s3, 4096, %s44, [#allocation6], 256, 256, 16
    $region17: #{tpu_custom_call.1} parent=1 // pred_fallthru
      _
    // Predicated region
    $region18: #{tpu_custom_call.1} parent=1 // pred_check
      _
    $region19: #{tpu_custom_call.1} parent=1 // pred_check_branch
      %51 = sbr.rel (0) target = $region21
    $region20: #{tpu_custom_call.1} parent=1 // pred_region
      _
    $region21: #{tpu_custom_call.1} parent=1 // pred_fallthru
      _
    // Predicated region
    $region22: #{tpu_custom_call.1} parent=1 // pred_check
      _
    $region23: #{tpu_custom_call.1} parent=1 // pred_check_branch
      %53 = sbr.rel (0) target = $region25
    $region24: #{tpu_custom_call.1} parent=1 // pred_region
      %s55 = ssub.s32 4096, 4096
      %56 = vsyncadd [#allocation9], %s55
      %s57 = sshll.u32 [#allocation8], 4
      %s58 = int_to_ptr.vmem [resolvable:$true] %s57
      %63 = dma.hbm_to_vmem [thread:$0]  %s5, 4096, %s58, [#allocation9], 64, 64, 4
    $region25: #{tpu_custom_call.1} parent=1 // pred_fallthru
      _
    // Predicated region
    $region26: #{tpu_custom_call.1} parent=1 // pred_check
      _
    $region27: #{tpu_custom_call.1} parent=1 // pred_check_branch
      %65 = sbr.rel (0) target = $region29
    $region28: #{tpu_custom_call.1} parent=1 // pred_region
      _
    $region29: #{tpu_custom_call.1} parent=1 // pred_fallthru
      _
    // Predicated region
    $region30: #{tpu_custom_call.1} parent=1 // pred_check
      _
    $region31: #{tpu_custom_call.1} parent=1 // pred_check_branch
      %67 = sbr.rel (0) target = $region33
    $region32: #{tpu_custom_call.1} parent=1 // pred_region
      %68 = dma.done [#allocation3], 64
    $region33: #{tpu_custom_call.1} parent=1 // pred_fallthru
      _
    // Predicated region
    $region34: #{tpu_custom_call.1} parent=1 // pred_check
      _
    $region35: #{tpu_custom_call.1} parent=1 // pred_check_branch
      %70 = sbr.rel (0) target = $region37
    $region36: #{tpu_custom_call.1} parent=1 // pred_region
      %71 = dma.done [#allocation6], 64
    $region37: #{tpu_custom_call.1} parent=1 // pred_fallthru
      _
    // Predicated region
    $region38: #{tpu_custom_call.1} parent=1 // pred_check
      _
    $region39: #{tpu_custom_call.1} parent=1 // pred_check_branch
      %73 = sbr.rel (0) target = $region41
    $region40: #{tpu_custom_call.1} parent=1 // pred_region
      %74 = dma.done [#allocation6], 4096
    $region41: #{tpu_custom_call.1} parent=1 // pred_fallthru
      _
    // Predicated region
    $region42: #{tpu_custom_call.1} parent=1 // pred_check
      _
    $region43: #{tpu_custom_call.1} parent=1 // pred_check_branch
      %76 = sbr.rel (0) target = $region45
    $region44: #{tpu_custom_call.1} parent=1 // pred_region
      %77 = dma.done [#allocation9], 4096
    $region45: #{tpu_custom_call.1} parent=1 // pred_fallthru
      _
    %v79 = vld [vmem:[#allocation2] sm:$0xf]
    %v80 = vld [vmem:[#allocation5] sm:$0xf]
    %v81 = vld [vmem:[%s2] sm:$0x1]
    %v83 = vlaneseq
    %v84 = vshrl.u32 %v83, 7
    %v85 = vsub.s32 0, %v84
    %v86 = vrot.slane %v81, %v85
    %vm88 = vcmask 56320
    %v90 = vsel %vm88, %v79, 0
    %vm92 = vcmask 1042432
    %vm93 = vcmask 1043456
    %v94 = vsel %vm92, 4294967295, 65535
    %v95 = vsel %vm93, %v94, 0
    %v97 = vand.u32 %v80, %v95
    %99 = vmatprep.subr.bf16.mxu0 0
    %100 = vmatpush1.bf16.msra.mxu0 %v97
    %101 = vmatprep.subr.bf16.mxu0 0
    %102 = vmatpush1.bf16.msra.mxu0 0
    %103 = vmatprep.subr.bf16.mxu0 0
    %104 = vmatpush1.bf16.msra.mxu0 0
    %105 = vmatprep.subr.bf16.mxu0 0
    %106 = vmatpush1.bf16.msra.mxu0 0
    %107 = vmatprep.subr.bf16.mxu0 0
    %108 = vmatpush1.bf16.msra.mxu0 0
    %109 = vmatprep.subr.bf16.mxu0 0
    %110 = vmatpush1.bf16.msra.mxu0 0
    %111 = vmatprep.subr.bf16.mxu0 0
    %112 = vmatpush1.bf16.msra.mxu0 0
    %113 = vmatprep.subr.bf16.mxu0 0
    %114 = vmatpush1.bf16.msra.mxu0 0
    %115 = vmatprep.subr.bf16.mxu0 0
    %116 = vmatpush1.bf16.msra.mxu0 0
    %117 = vmatprep.subr.bf16.mxu0 0
    %118 = vmatpush1.bf16.msra.mxu0 0
    %119 = vmatprep.subr.bf16.mxu0 0
    %120 = vmatpush1.bf16.msra.mxu0 0
    %121 = vmatprep.subr.bf16.mxu0 0
    %122 = vmatpush1.bf16.msra.mxu0 0
    %123 = vmatprep.subr.bf16.mxu0 0
    %124 = vmatpush1.bf16.msra.mxu0 0
    %125 = vmatprep.subr.bf16.mxu0 0
    %126 = vmatpush1.bf16.msra.mxu0 0
    %127 = vmatprep.subr.bf16.mxu0 0
    %128 = vmatpush1.bf16.msra.mxu0 0
    %129 = vmatprep.subr.bf16.mxu0 0
    %130 = vmatpush1.bf16.msra.mxu0 0
    %131 = vmatprep.mubr.bf16.mxu0 0
    %132 = vmatmul.mubr.bf16.gmra.mrb[0].mxu0 %v90
    %v133 = vpop.f32.mrb[0].mxu0
    %v134 = vadd.f32 %v86, %v133
    %v135 = vpop.f32.mrb[0].mxu0
    %v136 = vpop.f32.mrb[0].mxu0
    %v137 = vpop.f32.mrb[0].mxu0
    %138 = vdwg.mxu0
    %v139 = vmax.f32 %v134, 0.0
    %v140 = vpack.c.bf16 %v139, %v139
    %v141 = vld [vmem:[#allocation7] sm:$0xff]
    %v142 = vld [vmem:[#allocation7 + $0x8] sm:$0xff]
    %v143 = vld [vmem:[#allocation7 + $0x10] sm:$0xff]
    %v144 = vld [vmem:[#allocation7 + $0x18] sm:$0xff]
    %v145 = vld [vmem:[#allocation7 + $0x20] sm:$0xff]
    %v146 = vld [vmem:[#allocation7 + $0x28] sm:$0xff]
    %v147 = vld [vmem:[#allocation7 + $0x30] sm:$0xff]
    %v148 = vld [vmem:[#allocation7 + $0x38] sm:$0xff]
    %v149 = vld [vmem:[#allocation7 + $0x40] sm:$0xff]
    %v150 = vld [vmem:[#allocation7 + $0x48] sm:$0xff]
    %v151 = vld [vmem:[#allocation7 + $0x50] sm:$0xff]
    %v152 = vld [vmem:[#allocation7 + $0x58] sm:$0xff]
    %v153 = vld [vmem:[#allocation7 + $0x60] sm:$0xff]
    %v154 = vld [vmem:[#allocation7 + $0x68] sm:$0xff]
    %v155 = vld [vmem:[#allocation7 + $0x70] sm:$0xff]
    %v156 = vld [vmem:[#allocation7 + $0x78] sm:$0xff]
    %v157 = vld [vmem:[#allocation7 + $0x80] sm:$0xff]
    %v158 = vld [vmem:[#allocation7 + $0x88] sm:$0xff]
    %v159 = vld [vmem:[#allocation7 + $0x90] sm:$0xff]
    %v160 = vld [vmem:[#allocation7 + $0x98] sm:$0xff]
    %v161 = vld [vmem:[#allocation7 + $0xa0] sm:$0xff]
    %v162 = vld [vmem:[#allocation7 + $0xa8] sm:$0xff]
    %v163 = vld [vmem:[#allocation7 + $0xb0] sm:$0xff]
    %v164 = vld [vmem:[#allocation7 + $0xb8] sm:$0xff]
    %v165 = vld [vmem:[#allocation7 + $0xc0] sm:$0xff]
    %v166 = vld [vmem:[#allocation7 + $0xc8] sm:$0xff]
    %v167 = vld [vmem:[#allocation7 + $0xd0] sm:$0xff]
    %v168 = vld [vmem:[#allocation7 + $0xd8] sm:$0xff]
    %v169 = vld [vmem:[#allocation7 + $0xe0] sm:$0xff]
    %v170 = vld [vmem:[#allocation7 + $0xe8] sm:$0xff]
    %v171 = vld [vmem:[#allocation7 + $0xf0] sm:$0xff]
    %v172 = vld [vmem:[#allocation7 + $0xf8] sm:$0xff]
    %v173 = vld [vmem:[%s4] sm:$0xf]
    %v175 = vlaneseq
    %v176 = vshrl.u32 %v175, 7
    %v177 = vsub.s32 0, %v176
    %v178 = vrot.slane %v173, %v177
    %v179 = vlaneseq
    %v180 = vshrl.u32 %v179, 7
    %v181 = vsub.s32 1, %v180
    %v182 = vrot.slane %v173, %v181
    %v183 = vlaneseq
    %v184 = vshrl.u32 %v183, 7
    %v185 = vsub.s32 2, %v184
    %v186 = vrot.slane %v173, %v185
    %v187 = vlaneseq
    %v188 = vshrl.u32 %v187, 7
    %v189 = vsub.s32 3, %v188
    %v190 = vrot.slane %v173, %v189
    %v227 = vunpack.c.l.b16 %v141
    %v228 = vunpack.c.h.b16 %v141
    %v229 = vunpack.c.l.b16 %v142
    %v230 = vunpack.c.h.b16 %v142
    %v231 = vunpack.c.l.b16 %v143
    %v232 = vunpack.c.h.b16 %v143
    %v233 = vunpack.c.l.b16 %v144
    %v234 = vunpack.c.h.b16 %v144
    %v235 = vunpack.c.l.b16 %v145
    %v236 = vunpack.c.h.b16 %v145
    %v237 = vunpack.c.l.b16 %v146
    %v238 = vunpack.c.h.b16 %v146
    %v239 = vunpack.c.l.b16 %v147
    %v240 = vunpack.c.h.b16 %v147
    %v241 = vunpack.c.l.b16 %v148
    %v242 = vunpack.c.h.b16 %v148
    %v243 = vunpack.c.l.b16 %v149
    %v244 = vunpack.c.h.b16 %v149
    %v245 = vunpack.c.l.b16 %v150
    %v246 = vunpack.c.h.b16 %v150
    %v247 = vunpack.c.l.b16 %v151
    %v248 = vunpack.c.h.b16 %v151
    %v249 = vunpack.c.l.b16 %v152
    %v250 = vunpack.c.h.b16 %v152
    %v251 = vunpack.c.l.b16 %v153
    %v252 = vunpack.c.h.b16 %v153
    %v253 = vunpack.c.l.b16 %v154
    %v254 = vunpack.c.h.b16 %v154
    %v255 = vunpack.c.l.b16 %v155
    %v256 = vunpack.c.h.b16 %v155
    %v257 = vunpack.c.l.b16 %v156
    %v258 = vunpack.c.h.b16 %v156
    %v259 = vunpack.c.l.b16 %v157
    %v260 = vunpack.c.h.b16 %v157
    %v261 = vunpack.c.l.b16 %v158
    %v262 = vunpack.c.h.b16 %v158
    %v263 = vunpack.c.l.b16 %v159
    %v264 = vunpack.c.h.b16 %v159
    %v265 = vunpack.c.l.b16 %v160
    %v266 = vunpack.c.h.b16 %v160
    %v267 = vunpack.c.l.b16 %v161
    %v268 = vunpack.c.h.b16 %v161
    %v269 = vunpack.c.l.b16 %v162
    %v270 = vunpack.c.h.b16 %v162
    %v271 = vunpack.c.l.b16 %v163
    %v272 = vunpack.c.h.b16 %v163
    %v273 = vunpack.c.l.b16 %v164
    %v274 = vunpack.c.h.b16 %v164
    %v275 = vunpack.c.l.b16 %v165
    %v276 = vunpack.c.h.b16 %v165
    %v277 = vunpack.c.l.b16 %v166
    %v278 = vunpack.c.h.b16 %v166
    %v279 = vunpack.c.l.b16 %v167
    %v280 = vunpack.c.h.b16 %v167
    %v281 = vunpack.c.l.b16 %v168
    %v282 = vunpack.c.h.b16 %v168
    %v283 = vunpack.c.l.b16 %v169
    %v284 = vunpack.c.h.b16 %v169
    %v285 = vunpack.c.l.b16 %v170
    %v286 = vunpack.c.h.b16 %v170
    %v287 = vunpack.c.l.b16 %v171
    %v288 = vunpack.c.h.b16 %v171
    %v289 = vunpack.c.l.b16 %v172
    %v290 = vunpack.c.h.b16 %v172
    %v291 = vpack.c.b16 %v231, %v227
    %v292 = vpack.c.b16 %v232, %v228
    %v293 = vpack.c.b16 %v233, %v229
    %v294 = vpack.c.b16 %v234, %v230
    %v295 = vpack.c.b16 %v239, %v235
    %v296 = vpack.c.b16 %v240, %v236
    %v297 = vpack.c.b16 %v241, %v237
    %v298 = vpack.c.b16 %v242, %v238
    %v299 = vpack.c.b16 %v247, %v243
    %v300 = vpack.c.b16 %v248, %v244
    %v301 = vpack.c.b16 %v249, %v245
    %v302 = vpack.c.b16 %v250, %v246
    %v303 = vpack.c.b16 %v255, %v251
    %v304 = vpack.c.b16 %v256, %v252
    %v305 = vpack.c.b16 %v257, %v253
    %v306 = vpack.c.b16 %v258, %v254
    %v307 = vpack.c.b16 %v263, %v259
    %v308 = vpack.c.b16 %v264, %v260
    %v309 = vpack.c.b16 %v265, %v261
    %v310 = vpack.c.b16 %v266, %v262
    %v311 = vpack.c.b16 %v271, %v267
    %v312 = vpack.c.b16 %v272, %v268
    %v313 = vpack.c.b16 %v273, %v269
    %v314 = vpack.c.b16 %v274, %v270
    %v315 = vpack.c.b16 %v279, %v275
    %v316 = vpack.c.b16 %v280, %v276
    %v317 = vpack.c.b16 %v281, %v277
    %v318 = vpack.c.b16 %v282, %v278
    %v319 = vpack.c.b16 %v287, %v283
    %v320 = vpack.c.b16 %v288, %v284
    %v321 = vpack.c.b16 %v289, %v285
    %v322 = vpack.c.b16 %v290, %v286
    %355 = vmatprep.subr.bf16.mxu0 %v292
    %356 = vmatpush1.bf16.msra.mxu0 %v291
    %357 = vmatprep.subr.bf16.mxu0 %v296
    %358 = vmatpush1.bf16.msra.mxu0 %v295
    %359 = vmatprep.subr.bf16.mxu0 %v300
    %360 = vmatpush1.bf16.msra.mxu0 %v299
    %361 = vmatprep.subr.bf16.mxu0 %v304
    %362 = vmatpush1.bf16.msra.mxu0 %v303
    %363 = vmatprep.subr.bf16.mxu0 %v308
    %364 = vmatpush1.bf16.msra.mxu0 %v307
    %365 = vmatprep.subr.bf16.mxu0 %v312
    %366 = vmatpush1.bf16.msra.mxu0 %v311
    %367 = vmatprep.subr.bf16.mxu0 %v316
    %368 = vmatpush1.bf16.msra.mxu0 %v315
    %369 = vmatprep.subr.bf16.mxu0 %v320
    %370 = vmatpush1.bf16.msra.mxu0 %v319
    %371 = vmatprep.subr.bf16.mxu0 0
    %372 = vmatpush1.bf16.msra.mxu0 0
    %373 = vmatprep.subr.bf16.mxu0 0
    %374 = vmatpush1.bf16.msra.mxu0 0
    %375 = vmatprep.subr.bf16.mxu0 0
    %376 = vmatpush1.bf16.msra.mxu0 0
    %377 = vmatprep.subr.bf16.mxu0 0
    %378 = vmatpush1.bf16.msra.mxu0 0
    %379 = vmatprep.subr.bf16.mxu0 0
    %380 = vmatpush1.bf16.msra.mxu0 0
    %381 = vmatprep.subr.bf16.mxu0 0
    %382 = vmatpush1.bf16.msra.mxu0 0
    %383 = vmatprep.subr.bf16.mxu0 0
    %384 = vmatpush1.bf16.msra.mxu0 0
    %385 = vmatprep.subr.bf16.mxu0 0
    %386 = vmatpush1.bf16.msra.mxu0 0
    %387 = vmatprep.mubr.bf16.mxu0 0
    %388 = vmatmul.mubr.bf16.gmra.mrb[0].mxu0 %v140
    %v389 = vpop.f32.mrb[0].mxu0
    %v390 = vadd.f32 %v178, %v389
    %v391 = vpop.f32.mrb[0].mxu0
    %v392 = vadd.f32 %v182, %v391
    %v393 = vpop.f32.mrb[0].mxu0
    %v394 = vpop.f32.mrb[0].mxu0
    %395 = vdwg.mxu0
    %396 = vmatprep.subr.bf16.mxu0 %v294
    %397 = vmatpush1.bf16.msra.mxu0 %v293
    %398 = vmatprep.subr.bf16.mxu0 %v298
    %399 = vmatpush1.bf16.msra.mxu0 %v297
    %400 = vmatprep.subr.bf16.mxu0 %v302
    %401 = vmatpush1.bf16.msra.mxu0 %v301
    %402 = vmatprep.subr.bf16.mxu0 %v306
    %403 = vmatpush1.bf16.msra.mxu0 %v305
    %404 = vmatprep.subr.bf16.mxu0 %v310
    %405 = vmatpush1.bf16.msra.mxu0 %v309
    %406 = vmatprep.subr.bf16.mxu0 %v314
    %407 = vmatpush1.bf16.msra.mxu0 %v313
    %408 = vmatprep.subr.bf16.mxu0 %v318
    %409 = vmatpush1.bf16.msra.mxu0 %v317
    %410 = vmatprep.subr.bf16.mxu0 %v322
    %411 = vmatpush1.bf16.msra.mxu0 %v321
    %412 = vmatprep.subr.bf16.mxu0 0
    %413 = vmatpush1.bf16.msra.mxu0 0
    %414 = vmatprep.subr.bf16.mxu0 0
    %415 = vmatpush1.bf16.msra.mxu0 0
    %416 = vmatprep.subr.bf16.mxu0 0
    %417 = vmatpush1.bf16.msra.mxu0 0
    %418 = vmatprep.subr.bf16.mxu0 0
    %419 = vmatpush1.bf16.msra.mxu0 0
    %420 = vmatprep.subr.bf16.mxu0 0
    %421 = vmatpush1.bf16.msra.mxu0 0
    %422 = vmatprep.subr.bf16.mxu0 0
    %423 = vmatpush1.bf16.msra.mxu0 0
    %424 = vmatprep.subr.bf16.mxu0 0
    %425 = vmatpush1.bf16.msra.mxu0 0
    %426 = vmatprep.subr.bf16.mxu0 0
    %427 = vmatpush1.bf16.msra.mxu0 0
    %428 = vmatprep.mubr.bf16.mxu0 0
    %429 = vmatmul.mubr.bf16.gmra.mrb[0].mxu0 %v140
    %v430 = vpop.f32.mrb[0].mxu0
    %v431 = vadd.f32 %v186, %v430
    %v432 = vpop.f32.mrb[0].mxu0
    %v433 = vadd.f32 %v190, %v432
    %v434 = vpop.f32.mrb[0].mxu0
    %v435 = vpop.f32.mrb[0].mxu0
    %436 = vdwg.mxu0
    %v437 = vmax.f32 %v390, 0.0
    %v438 = vmax.f32 %v392, 0.0
    %v439 = vmax.f32 %v431, 0.0
    %v440 = vmax.f32 %v433, 0.0
    %v441 = vpack.c.bf16 %v437, %v437
    %v442 = vpack.c.bf16 %v438, %v438
    %v443 = vpack.c.bf16 %v439, %v439
    %v444 = vpack.c.bf16 %v440, %v440
    %v445 = vld [vmem:[#allocation8] sm:$0xf]
    %v446 = vld [vmem:[#allocation8 + $0x4] sm:$0xf]
    %v447 = vld [vmem:[#allocation8 + $0x8] sm:$0xf]
    %v448 = vld [vmem:[#allocation8 + $0xc] sm:$0xf]
    %v449 = vld [vmem:[#allocation8 + $0x10] sm:$0xf]
    %v450 = vld [vmem:[#allocation8 + $0x14] sm:$0xf]
    %v451 = vld [vmem:[#allocation8 + $0x18] sm:$0xf]
    %v452 = vld [vmem:[#allocation8 + $0x1c] sm:$0xf]
    %v453 = vld [vmem:[#allocation8 + $0x20] sm:$0xf]
    %v454 = vld [vmem:[#allocation8 + $0x24] sm:$0xf]
    %v455 = vld [vmem:[#allocation8 + $0x28] sm:$0xf]
    %v456 = vld [vmem:[#allocation8 + $0x2c] sm:$0xf]
    %v457 = vld [vmem:[#allocation8 + $0x30] sm:$0xf]
    %v458 = vld [vmem:[#allocation8 + $0x34] sm:$0xf]
    %v459 = vld [vmem:[#allocation8 + $0x38] sm:$0xf]
    %v460 = vld [vmem:[#allocation8 + $0x3c] sm:$0xf]
    %v461 = vld [vmem:[#allocation8 + $0x40] sm:$0xf]
    %v462 = vld [vmem:[#allocation8 + $0x44] sm:$0xf]
    %v463 = vld [vmem:[#allocation8 + $0x48] sm:$0xf]
    %v464 = vld [vmem:[#allocation8 + $0x4c] sm:$0xf]
    %v465 = vld [vmem:[#allocation8 + $0x50] sm:$0xf]
    %v466 = vld [vmem:[#allocation8 + $0x54] sm:$0xf]
    %v467 = vld [vmem:[#allocation8 + $0x58] sm:$0xf]
    %v468 = vld [vmem:[#allocation8 + $0x5c] sm:$0xf]
    %v469 = vld [vmem:[#allocation8 + $0x60] sm:$0xf]
    %v470 = vld [vmem:[#allocation8 + $0x64] sm:$0xf]
    %v471 = vld [vmem:[#allocation8 + $0x68] sm:$0xf]
    %v472 = vld [vmem:[#allocation8 + $0x6c] sm:$0xf]
    %v473 = vld [vmem:[#allocation8 + $0x70] sm:$0xf]
    %v474 = vld [vmem:[#allocation8 + $0x74] sm:$0xf]
    %v475 = vld [vmem:[#allocation8 + $0x78] sm:$0xf]
    %v476 = vld [vmem:[#allocation8 + $0x7c] sm:$0xf]
    %v477 = vld [vmem:[#allocation8 + $0x80] sm:$0xf]
    %v478 = vld [vmem:[#allocation8 + $0x84] sm:$0xf]
    %v479 = vld [vmem:[#allocation8 + $0x88] sm:$0xf]
    %v480 = vld [vmem:[#allocation8 + $0x8c] sm:$0xf]
    %v481 = vld [vmem:[#allocation8 + $0x90] sm:$0xf]
    %v482 = vld [vmem:[#allocation8 + $0x94] sm:$0xf]
    %v483 = vld [vmem:[#allocation8 + $0x98] sm:$0xf]
    %v484 = vld [vmem:[#allocation8 + $0x9c] sm:$0xf]
    %v485 = vld [vmem:[#allocation8 + $0xa0] sm:$0xf]
    %v486 = vld [vmem:[#allocation8 + $0xa4] sm:$0xf]
    %v487 = vld [vmem:[#allocation8 + $0xa8] sm:$0xf]
    %v488 = vld [vmem:[#allocation8 + $0xac] sm:$0xf]
    %v489 = vld [vmem:[#allocation8 + $0xb0] sm:$0xf]
    %v490 = vld [vmem:[#allocation8 + $0xb4] sm:$0xf]
    %v491 = vld [vmem:[#allocation8 + $0xb8] sm:$0xf]
    %v492 = vld [vmem:[#allocation8 + $0xbc] sm:$0xf]
    %v493 = vld [vmem:[#allocation8 + $0xc0] sm:$0xf]
    %v494 = vld [vmem:[#allocation8 + $0xc4] sm:$0xf]
    %v495 = vld [vmem:[#allocation8 + $0xc8] sm:$0xf]
    %v496 = vld [vmem:[#allocation8 + $0xcc] sm:$0xf]
    %v497 = vld [vmem:[#allocation8 + $0xd0] sm:$0xf]
    %v498 = vld [vmem:[#allocation8 + $0xd4] sm:$0xf]
    %v499 = vld [vmem:[#allocation8 + $0xd8] sm:$0xf]
    %v500 = vld [vmem:[#allocation8 + $0xdc] sm:$0xf]
    %v501 = vld [vmem:[#allocation8 + $0xe0] sm:$0xf]
    %v502 = vld [vmem:[#allocation8 + $0xe4] sm:$0xf]
    %v503 = vld [vmem:[#allocation8 + $0xe8] sm:$0xf]
    %v504 = vld [vmem:[#allocation8 + $0xec] sm:$0xf]
    %v505 = vld [vmem:[#allocation8 + $0xf0] sm:$0xf]
    %v506 = vld [vmem:[#allocation8 + $0xf4] sm:$0xf]
    %v507 = vld [vmem:[#allocation8 + $0xf8] sm:$0xf]
    %v508 = vld [vmem:[#allocation8 + $0xfc] sm:$0xf]
    %v509 = vld [vmem:[%s6] sm:$0x1]
    %v511 = vlaneseq
    %v512 = vshrl.u32 %v511, 7
    %v513 = vsub.s32 0, %v512
    %v514 = vrot.slane %v509, %v513
    %v580 = vunpack.c.l.b16 %v445
    %v581 = vunpack.c.l.b16 %v446
    %v582 = vunpack.c.l.b16 %v447
    %v583 = vunpack.c.l.b16 %v448
    %v584 = vunpack.c.l.b16 %v449
    %v585 = vunpack.c.l.b16 %v450
    %v586 = vunpack.c.l.b16 %v451
    %v587 = vunpack.c.l.b16 %v452
    %v588 = vunpack.c.l.b16 %v453
    %v589 = vunpack.c.l.b16 %v454
    %v590 = vunpack.c.l.b16 %v455
    %v591 = vunpack.c.l.b16 %v456
    %v592 = vunpack.c.l.b16 %v457
    %v593 = vunpack.c.l.b16 %v458
    %v594 = vunpack.c.l.b16 %v459
    %v595 = vunpack.c.l.b16 %v460
    %v596 = vunpack.c.l.b16 %v461
    %v597 = vunpack.c.l.b16 %v462
    %v598 = vunpack.c.l.b16 %v463
    %v599 = vunpack.c.l.b16 %v464
    %v600 = vunpack.c.l.b16 %v465
    %v601 = vunpack.c.l.b16 %v466
    %v602 = vunpack.c.l.b16 %v467
    %v603 = vunpack.c.l.b16 %v468
    %v604 = vunpack.c.l.b16 %v469
    %v605 = vunpack.c.l.b16 %v470
    %v606 = vunpack.c.l.b16 %v471
    %v607 = vunpack.c.l.b16 %v472
    %v608 = vunpack.c.l.b16 %v473
    %v609 = vunpack.c.l.b16 %v474
    %v610 = vunpack.c.l.b16 %v475
    %v611 = vunpack.c.l.b16 %v476
    %v612 = vunpack.c.l.b16 %v477
    %v613 = vunpack.c.l.b16 %v478
    %v614 = vunpack.c.l.b16 %v479
    %v615 = vunpack.c.l.b16 %v480
    %v616 = vunpack.c.l.b16 %v481
    %v617 = vunpack.c.l.b16 %v482
    %v618 = vunpack.c.l.b16 %v483
    %v619 = vunpack.c.l.b16 %v484
    %v620 = vunpack.c.l.b16 %v485
    %v621 = vunpack.c.l.b16 %v486
    %v622 = vunpack.c.l.b16 %v487
    %v623 = vunpack.c.l.b16 %v488
    %v624 = vunpack.c.l.b16 %v489
    %v625 = vunpack.c.l.b16 %v490
    %v626 = vunpack.c.l.b16 %v491
    %v627 = vunpack.c.l.b16 %v492
    %v628 = vunpack.c.l.b16 %v493
    %v629 = vunpack.c.l.b16 %v494
    %v630 = vunpack.c.l.b16 %v495
    %v631 = vunpack.c.l.b16 %v496
    %v632 = vunpack.c.l.b16 %v497
    %v633 = vunpack.c.l.b16 %v498
    %v634 = vunpack.c.l.b16 %v499
    %v635 = vunpack.c.l.b16 %v500
    %v636 = vunpack.c.l.b16 %v501
    %v637 = vunpack.c.l.b16 %v502
    %v638 = vunpack.c.l.b16 %v503
    %v639 = vunpack.c.l.b16 %v504
    %v640 = vunpack.c.l.b16 %v505
    %v641 = vunpack.c.l.b16 %v506
    %v642 = vunpack.c.l.b16 %v507
    %v643 = vunpack.c.l.b16 %v508
    %v644 = vpack.c.b16 %v581, %v580
    %v645 = vpack.c.b16 %v583, %v582
    %v646 = vpack.c.b16 %v585, %v584
    %v647 = vpack.c.b16 %v587, %v586
    %v648 = vpack.c.b16 %v589, %v588
    %v649 = vpack.c.b16 %v591, %v590
    %v650 = vpack.c.b16 %v593, %v592
    %v651 = vpack.c.b16 %v595, %v594
    %v652 = vpack.c.b16 %v597, %v596
    %v653 = vpack.c.b16 %v599, %v598
    %v654 = vpack.c.b16 %v601, %v600
    %v655 = vpack.c.b16 %v603, %v602
    %v656 = vpack.c.b16 %v605, %v604
    %v657 = vpack.c.b16 %v607, %v606
    %v658 = vpack.c.b16 %v609, %v608
    %v659 = vpack.c.b16 %v611, %v610
    %v660 = vpack.c.b16 %v613, %v612
    %v661 = vpack.c.b16 %v615, %v614
    %v662 = vpack.c.b16 %v617, %v616
    %v663 = vpack.c.b16 %v619, %v618
    %v664 = vpack.c.b16 %v621, %v620
    %v665 = vpack.c.b16 %v623, %v622
    %v666 = vpack.c.b16 %v625, %v624
    %v667 = vpack.c.b16 %v627, %v626
    %v668 = vpack.c.b16 %v629, %v628
    %v669 = vpack.c.b16 %v631, %v630
    %v670 = vpack.c.b16 %v633, %v632
    %v671 = vpack.c.b16 %v635, %v634
    %v672 = vpack.c.b16 %v637, %v636
    %v673 = vpack.c.b16 %v639, %v638
    %v674 = vpack.c.b16 %v641, %v640
    %v675 = vpack.c.b16 %v643, %v642
    %708 = vmatprep.subr.bf16.mxu0 0
    %709 = vmatpush1.bf16.msra.mxu0 %v644
    %710 = vmatprep.subr.bf16.mxu0 0
    %711 = vmatpush1.bf16.msra.mxu0 %v645
    %712 = vmatprep.subr.bf16.mxu0 0
    %713 = vmatpush1.bf16.msra.mxu0 %v646
    %714 = vmatprep.subr.bf16.mxu0 0
    %715 = vmatpush1.bf16.msra.mxu0 %v647
    %716 = vmatprep.subr.bf16.mxu0 0
    %717 = vmatpush1.bf16.msra.mxu0 %v648
    %718 = vmatprep.subr.bf16.mxu0 0
    %719 = vmatpush1.bf16.msra.mxu0 %v649
    %720 = vmatprep.subr.bf16.mxu0 0
    %721 = vmatpush1.bf16.msra.mxu0 %v650
    %722 = vmatprep.subr.bf16.mxu0 0
    %723 = vmatpush1.bf16.msra.mxu0 %v651
    %724 = vmatprep.subr.bf16.mxu0 0
    %725 = vmatpush1.bf16.msra.mxu0 %v652
    %726 = vmatprep.subr.bf16.mxu0 0
    %727 = vmatpush1.bf16.msra.mxu0 %v653
    %728 = vmatprep.subr.bf16.mxu0 0
    %729 = vmatpush1.bf16.msra.mxu0 %v654
    %730 = vmatprep.subr.bf16.mxu0 0
    %731 = vmatpush1.bf16.msra.mxu0 %v655
    %732 = vmatprep.subr.bf16.mxu0 0
    %733 = vmatpush1.bf16.msra.mxu0 %v656
    %734 = vmatprep.subr.bf16.mxu0 0
    %735 = vmatpush1.bf16.msra.mxu0 %v657
    %736 = vmatprep.subr.bf16.mxu0 0
    %737 = vmatpush1.bf16.msra.mxu0 %v658
    %738 = vmatprep.subr.bf16.mxu0 0
    %739 = vmatpush1.bf16.msra.mxu0 %v659
    %740 = vmatprep.mubr.bf16.mxu0 %v442
    %741 = vmatmul.mubr.bf16.gmra.mrb[0].mxu0 %v441
    %v742 = vpop.f32.mrb[0].mxu0
    %v743 = vadd.f32 %v514, %v742
    %v744 = vpop.f32.mrb[0].mxu0
    %v745 = vpop.f32.mrb[0].mxu0
    %v746 = vpop.f32.mrb[0].mxu0
    %747 = vdwg.mxu0
    %748 = vmatprep.subr.bf16.mxu0 0
    %749 = vmatpush1.bf16.msra.mxu0 %v660
    %750 = vmatprep.subr.bf16.mxu0 0
    %751 = vmatpush1.bf16.msra.mxu0 %v661
    %752 = vmatprep.subr.bf16.mxu0 0
    %753 = vmatpush1.bf16.msra.mxu0 %v662
    %754 = vmatprep.subr.bf16.mxu0 0
    %755 = vmatpush1.bf16.msra.mxu0 %v663
    %756 = vmatprep.subr.bf16.mxu0 0
    %757 = vmatpush1.bf16.msra.mxu0 %v664
    %758 = vmatprep.subr.bf16.mxu0 0
    %759 = vmatpush1.bf16.msra.mxu0 %v665
    %760 = vmatprep.subr.bf16.mxu0 0
    %761 = vmatpush1.bf16.msra.mxu0 %v666
    %762 = vmatprep.subr.bf16.mxu0 0
    %763 = vmatpush1.bf16.msra.mxu0 %v667
    %764 = vmatprep.subr.bf16.mxu0 0
    %765 = vmatpush1.bf16.msra.mxu0 %v668
    %766 = vmatprep.subr.bf16.mxu0 0
    %767 = vmatpush1.bf16.msra.mxu0 %v669
    %768 = vmatprep.subr.bf16.mxu0 0
    %769 = vmatpush1.bf16.msra.mxu0 %v670
    %770 = vmatprep.subr.bf16.mxu0 0
    %771 = vmatpush1.bf16.msra.mxu0 %v671
    %772 = vmatprep.subr.bf16.mxu0 0
    %773 = vmatpush1.bf16.msra.mxu0 %v672
    %774 = vmatprep.subr.bf16.mxu0 0
    %775 = vmatpush1.bf16.msra.mxu0 %v673
    %776 = vmatprep.subr.bf16.mxu0 0
    %777 = vmatpush1.bf16.msra.mxu0 %v674
    %778 = vmatprep.subr.bf16.mxu0 0
    %779 = vmatpush1.bf16.msra.mxu0 %v675
    %780 = vmatprep.mubr.bf16.mxu0 %v444
    %781 = vmatmul.mubr.bf16.gmra.mrb[0].mxu0 %v443
    %v782 = vpop.f32.mrb[0].mxu0
    %v783 = vadd.f32 %v743, %v782
    %v784 = vpop.f32.mrb[0].mxu0
    %v785 = vpop.f32.mrb[0].mxu0
    %v786 = vpop.f32.mrb[0].mxu0
    %787 = vdwg.mxu0
    %v788 = vpack.c.bf16 %v783, %v783
    %789 = vst [vmem:[#allocation10] sm:$0xf] %v788
    // Predicated region
    $region46: #{tpu_custom_call.1} parent=1 // pred_check
      _
    $region47: #{tpu_custom_call.1} parent=1 // pred_check_branch
      %791 = sbr.rel (0) target = $region49
    $region48: #{tpu_custom_call.1} parent=1 // pred_region
      %s793 = ssub.s32 64, 64
      %794 = vsyncadd [#allocation4], %s793
      %s796 = sshll.u32 [#allocation10], 4
      %s797 = int_to_ptr.vmem [resolvable:$true] %s796
      %799 = dma.vmem_to_hbm [thread:$0]  %s797, 64, %s7, [#allocation4]
    $region49: #{tpu_custom_call.1} parent=1 // pred_fallthru
      _
    // Predicated region
    $region50: #{tpu_custom_call.1} parent=1 // pred_check
      _
    $region51: #{tpu_custom_call.1} parent=1 // pred_check_branch
      %801 = sbr.rel (0) target = $region53
    $region52: #{tpu_custom_call.1} parent=1 // pred_region
      %802 = dma.done [#allocation4], 64
    $region53: #{tpu_custom_call.1} parent=1 // pred_fallthru
      _
    %803 = vsyncpa [#allocation3], 1
    %804 = vsyncpa [#allocation6], 1
    %805 = vsyncpa [#allocation9], 1
    %806 = vsyncpa [#allocation4], 1

</llo_original>
